<compile_context>
chip_gen: v7x
topology: tpu7x:2x2x1
jax: 0.10.0
libtpu: 0.0.40
codegen_flags: <defaults>
</compile_context>

<pallas_src>
import jax
import jax.numpy as jnp
from jax.experimental import pallas as pl
from jax.experimental.pallas import tpu as pltpu


def _identity_kernel(x_ref, o_ref):
    # The entire "compute" of OnDemandUnloader.forward: pass inputs through.
    o_ref[...] = x_ref[...]


def _plan_layout(shape, dtype):
    """Pick a lane-dense 2-D view (rows, cols) and a ~2 MiB row block."""
    total = 1
    for d in shape:
        total *= d
    itemsize = jnp.dtype(dtype).itemsize

    # dtype-aware sublane packing: 8 rows for 32-bit, 16 for bf16, 32 for int8/fp8.
    sublane_pack = 8 * max(1, 4 // itemsize)

    LANE = 128
    if total % LANE != 0:
        # Odd element count: single full-extent block (only tiny/odd shapes hit this).
        return (1, total), 1, 1

    # Widest lane-dense slab: largest multiple of 128 dividing total (<= 2048 lanes)
    # -> unmasked full-width stores, fewer grid steps.
    cols = LANE
    while cols * 2 <= 2048 and total % (cols * 2) == 0:
        cols *= 2
    rows = total // cols

    # ~2 MiB blocks saturate HBM BW on v5e/v6e/v7x while keeping
    # (in + out) x double-buffering well under the 16/32 MiB scoped VMEM limits.
    target_block_bytes = 2 * 1024 * 1024
    max_block_rows = max(1, target_block_bytes // (cols * itemsize))
    max_block_rows = max(sublane_pack, (max_block_rows // sublane_pack) * sublane_pack)

    if rows <= max_block_rows:
        block_rows = rows          # full-extent block (legal for any row count)
        grid_len = 1
    else:
        block_rows = max_block_rows
        # cdiv gridding: keep the large tile; Pallas masks the partial last block.
        grid_len = pl.cdiv(rows, block_rows)
    return (rows, cols), block_rows, grid_len


def _identity_copy_2d(x2d, block_rows, grid_len):
    rows, cols = x2d.shape
    itemsize = jnp.dtype(x2d.dtype).itemsize
    return pl.pallas_call(
        _identity_kernel,
        out_shape=jax.ShapeDtypeStruct((rows, cols), x2d.dtype),
        grid_spec=pltpu.PrefetchScalarGridSpec(
            num_scalar_prefetch=0,
            grid=(grid_len,),
            in_specs=[pl.BlockSpec((block_rows, cols), lambda i: (i, 0))],
            out_specs=pl.BlockSpec((block_rows, cols), lambda i: (i, 0)),
        ),
        compiler_params=pltpu.CompilerParams(
            dimension_semantics=("parallel",),  # shards row axis across v7x's 2 TCs
        ),
        # Output aliases the input buffer: no extra HBM allocation; XLA may
        # elide the copy altogether (it's a pure identity).
        input_output_aliases={0: 0},
        # Advisory: pure mem-bound op, zero compute.
        cost_estimate=pl.CostEstimate(
            flops=0,
            transcendentals=0,
            bytes_accessed=2 * rows * cols * itemsize,
        ),
    )(x2d)


@jax.jit
def on_demand_unloader_forward(inputs: jax.Array) -> jax.Array:
    """Pallas implementation of OnDemandUnloader.forward (identity on inputs)."""
    orig_shape = inputs.shape
    (rows, cols), block_rows, grid_len = _plan_layout(orig_shape, inputs.dtype)
    x2d = inputs.reshape(rows, cols)          # layout plumbing only; values untouched
    out2d = _identity_copy_2d(x2d, block_rows, grid_len)
    return out2d.reshape(orig_shape)


if __name__ == "__main__":
    key = jax.random.PRNGKey(0)

    # Small NCHW activation, consistent with what the module passes through.
    x = jax.random.normal(key, (2, 4, 16, 16), dtype=jnp.float32)

    # Deterministic "collected params/buffers" the OnDemandUnloader would manage.
    # They play no role in the on-device forward (identity); host-side state only.
    k1, k2 = jax.random.split(key)
    collected_params = {
        "conv.weight": jax.random.normal(k1, (4, 4, 3, 3), dtype=jnp.float32),
    }
    collected_buffers = {
        "bn.running_mean": jax.random.normal(k2, (4,), dtype=jnp.float32),
    }
    del collected_params, collected_buffers  # no Pallas equivalent; unused on device

    y = on_demand_unloader_forward(x)
    y = jax.block_until_ready(y)

    assert y.shape == x.shape and y.dtype == x.dtype
    assert bool(jnp.all(y == x))

    print("KERNEL_OK")
</pallas_src>

<mosaic_0001>
module attributes {stable_mosaic.version = 11 : i64} {
  func.func @_identity_kernel(%arg0: i32, %arg1: memref<1x2048xf32, #tpu.memory_space<vmem>>, %arg2: memref<1x2048xf32, #tpu.memory_space<vmem>>) attributes {dimension_semantics = [#tpu.dimension_semantics<parallel>], iteration_bounds = array<i64: 1>, scalar_prefetch = 0 : i64, scratch_operands = 0 : i64, tpu.core_type = #tpu.core_type<tc>, window_params = [{transform_indices = @transform_0, window_bounds = array<i64: 1, 2048>}, {transform_indices = @transform_1, window_bounds = array<i64: 1, 2048>}]} {
    %c0 = arith.constant 0 : index
    %c0_0 = arith.constant 0 : index
    %0 = vector.load %arg1[%c0, %c0_0] : memref<1x2048xf32, #tpu.memory_space<vmem>>, vector<1x2048xf32>
    %c0_1 = arith.constant 0 : index
    %c0_2 = arith.constant 0 : index
    %1 = vector.load %arg2[%c0_1, %c0_2] : memref<1x2048xf32, #tpu.memory_space<vmem>>, vector<1x2048xf32>
    tpu.vector_store %arg2[%c0_1, %c0_2], %0 {strides = array<i32>} : memref<1x2048xf32, #tpu.memory_space<vmem>>, vector<1x2048xf32>,
    return
  }
  func.func @transform_0(%arg0: i32) -> (i32, i32) {
    %c0_i32 = arith.constant 0 : i32
    %c0_i32_0 = arith.constant 0 : i32
    return %arg0, %c0_i32 : i32, i32
  }
  func.func @transform_1(%arg0: i32) -> (i32, i32) {
    %c0_i32 = arith.constant 0 : i32
    %c0_i32_0 = arith.constant 0 : i32
    return %arg0, %c0_i32 : i32, i32
  }
}

</mosaic_0001>

<llo_original>
// kernel: on_demand_unloader_forward.1
$region0: #{on_demand_unloader_forward.1}
  #allocation0 [shape = 'u32[]', space=smem, size = 0x4, offset = 0x4, fixed_abs, tag = 'smem constant byte address 0x4 - core index']
  #allocation1 [shape = 'u32[144,128]{1,0:T(1,128)}', space=vmem, size = 0x12000, scoped, tag = 'internal scratch']
  %s0 = inlined_call_operand.vmem [shape: f32[1,2048], index: 0, kind: input, shape index: {}, may-alias: {0,1}]
  %s1 = inlined_call_operand.vmem [shape: f32[1,2048], index: 1, kind: output, shape index: {}, may-alias: {0,1}]
  %s2 = sld [smem:[#allocation0]]
  $region14: #{on_demand_unloader_forward.1} parent=0
    _
  %s4 = ssub.s32 1, %s2
  %s5 = scalar_select 0, %s4, %s2
  // Predicated region
  $region2: #{on_demand_unloader_forward.1} parent=0 // pred_check
    _
  $region3: #{on_demand_unloader_forward.1} parent=0 // pred_check_branch
    %7 = sbr.rel (0) target = $region5
  $region4: #{on_demand_unloader_forward.1} parent=0 // pred_region
    _
  $region5: #{on_demand_unloader_forward.1} parent=0 // pred_fallthru
    _
  %v8 = vld [vmem:[%s0] sm:$0xff]
  %v9 = vld [vmem:[%s0 + $0x8] sm:$0xff]
  %10 = vst [vmem:[%s1] sm:$0xff] %v8
  %11 = vst [vmem:[%s1 + $0x8] sm:$0xff] %v9
  // Predicated region
  $region6: #{on_demand_unloader_forward.1} parent=0 // pred_check
    _
  $region7: #{on_demand_unloader_forward.1} parent=0 // pred_check_branch
    %13 = sbr.rel (0) target = $region9
  $region8: #{on_demand_unloader_forward.1} parent=0 // pred_region
    _
  $region9: #{on_demand_unloader_forward.1} parent=0 // pred_fallthru
    _
  // Predicated region
  $region10: #{on_demand_unloader_forward.1} parent=0 // pred_check
    _
  $region11: #{on_demand_unloader_forward.1} parent=0 // pred_check_branch
    %15 = sbr.rel (0) target = $region13
  $region12: #{on_demand_unloader_forward.1} parent=0 // pred_region
    _
  $region13: #{on_demand_unloader_forward.1} parent=0 // pred_fallthru
    _

</llo_original>
